<compile_context>
chip_gen: v5e
topology: v5e:2x2
jax: 0.10.0
libtpu: 0.0.40
codegen_flags: <defaults>
</compile_context>

<pallas_src>
import functools

import jax
import jax.numpy as jnp
from jax.experimental import pallas as pl
from jax.experimental.pallas import tpu as pltpu

BN_EPS = 1e-5
SUB = 8      # f32 sublane multiple
LANE = 128   # lane multiple


def _round_up(x, m):
    return ((x + m - 1) // m) * m


def _pad_to(x, target, axis):
    pad = target - x.shape[axis]
    if pad == 0:
        return x
    widths = [(0, 0)] * x.ndim
    widths[axis] = (0, pad)
    return jnp.pad(x, widths)


def _vmem_budget_bytes():
    """Per-generation VMEM budget: ~75% of physical, capped at 100 MiB."""
    cap = None
    try:
        info = pltpu.get_tpu_info()
        cap = getattr(info, "vmem_capacity_bytes", None)
    except Exception:
        cap = None
    if not cap:
        cap = 64 * 1024 * 1024  # conservative default: v7x per-TensorCore VMEM
    return min(int(cap) * 3 // 4, 100 * 1024 * 1024)


VMEM_BUDGET = _vmem_budget_bytes()


def _choose_tile(hw, cin_p, cout_p, budget):
    """Pick (tm, hw_p): lane tile width (multiple of 128) and padded HW.

    tm is sized from the VMEM budget (double-buffered in+out tiles + weight),
    preferring widths that divide the 128-rounded HW so no HBM pad copy of x
    is needed.
    """
    w_bytes = cout_p * cin_p * 4
    per_lane = 8 * (cin_p + cout_p)          # 2 buffers * (in + out) * 4 bytes
    tm_cap = (budget - w_bytes - (1 << 20)) // per_lane
    tm_cap = max(LANE, min(2048, (tm_cap // LANE) * LANE))

    hw_128 = _round_up(hw, LANE)
    if hw_128 <= tm_cap:
        return hw_128, hw_128                # one lane tile, minimal padding

    # largest multiple of 128 that divides hw_128 and fits the budget
    k = hw_128 // LANE
    best = LANE
    d = 1
    while d * d <= k:
        if k % d == 0:
            for dd in (d, k // d):
                t = dd * LANE
                if best < t <= tm_cap:
                    best = t
        d += 1
    if best >= 512:
        return best, hw_128
    # ragged fallback: pad HW up to a bigger tile only if the waste is small
    tm_pad = min(tm_cap, 1024)
    hw_pad = _round_up(hw, tm_pad)
    if hw_pad - hw_128 <= hw_128 // 4:
        return tm_pad, hw_pad
    return best, hw_128


# --------------------- fully fused single-call path ---------------------------
def _fused_kernel(x_ref, w_ref, g_ref, b_ref, o_ref, *, n, inv_count):
    # 1x1 conv (no bias: exactly cancelled by training-mode BN mean subtraction)
    s = None
    ssq = None
    for i in range(n):
        y = jnp.dot(w_ref[...], x_ref[i], preferred_element_type=jnp.float32)
        o_ref[i] = y
        si = jnp.sum(y, axis=1, keepdims=True)
        qi = jnp.sum(y * y, axis=1, keepdims=True)
        s = si if s is None else s + si
        ssq = qi if ssq is None else ssq + qi
    mean = s * inv_count
    var = jnp.maximum(ssq * inv_count - mean * mean, 0.0)
    inv_std = jax.lax.rsqrt(var + BN_EPS)
    scale = g_ref[...] * inv_std
    shift = b_ref[...] - mean * scale
    for i in range(n):
        o_ref[i] = jnp.maximum(o_ref[i] * scale + shift, 0.0).astype(o_ref.dtype)


# --------------------- pass 1 variants (per-batch partial stats) --------------
def _stats_kernel(x_ref, w_ref, sum_ref, ssq_ref):
    @pl.when(pl.program_id(1) == 0)
    def _():
        sum_ref[...] = jnp.zeros_like(sum_ref)
        ssq_ref[...] = jnp.zeros_like(ssq_ref)

    y = jnp.dot(w_ref[...], x_ref[0], preferred_element_type=jnp.float32)
    sum_ref[0] += jnp.sum(y, axis=1, keepdims=True)
    ssq_ref[0] += jnp.sum(y * y, axis=1, keepdims=True)


def _stats_cache_y_kernel(x_ref, w_ref, y_ref, sum_ref, ssq_ref):
    @pl.when(pl.program_id(1) == 0)
    def _():
        sum_ref[...] = jnp.zeros_like(sum_ref)
        ssq_ref[...] = jnp.zeros_like(ssq_ref)

    y = jnp.dot(w_ref[...], x_ref[0], preferred_element_type=jnp.float32)
    y_ref[0] = y
    sum_ref[0] += jnp.sum(y, axis=1, keepdims=True)
    ssq_ref[0] += jnp.sum(y * y, axis=1, keepdims=True)


# --------------------- pass 2 variants ----------------------------------------
def _apply_recompute_kernel(x_ref, w_ref, shift_ref, o_ref):
    # BN scale is pre-folded into the weight: just matmul + shift + ReLU.
    y = jnp.dot(w_ref[...], x_ref[0], preferred_element_type=jnp.float32)
    o_ref[0] = jnp.maximum(y + shift_ref[...], 0.0).astype(o_ref.dtype)


def _apply_cached_kernel(y_ref, scale_ref, shift_ref, o_ref):
    o_ref[0] = jnp.maximum(
        y_ref[0] * scale_ref[...] + shift_ref[...], 0.0).astype(o_ref.dtype)


@functools.partial(jax.jit, static_argnames=("mode",))
def ch_forward(x, weight, bias, gamma, beta, *, mode="auto"):
    """x: (N, Cin, H, W) f32; weight: (Cout, Cin); bias/gamma/beta: (Cout,)."""
    del bias  # cancelled exactly by training-mode BN mean subtraction
    n, cin, h, w = x.shape
    cout = weight.shape[0]
    hw = h * w
    inv_count = 1.0 / float(n * hw)        # GLOBAL divisor for batch statistics

    cin_p = _round_up(cin, SUB)
    cout_p = _round_up(cout, SUB)
    tm, hw_p = _choose_tile(hw, cin_p, cout_p, VMEM_BUDGET)
    n_tiles = hw_p // tm

    # NCHW is already channel-major per batch element: flatten H*W onto the
    # lane axis.  Channel pad (to 8) and lane pad (to 128) are no-ops for the
    # real model shapes; zero-padded columns contribute 0 to the stats.
    x3 = x.reshape(n, cin, hw).astype(jnp.float32)
    x3 = _pad_to(_pad_to(x3, cin_p, 1), hw_p, 2)
    w_p = _pad_to(_pad_to(weight.astype(jnp.float32), cout_p, 0), cin_p, 1)
    g_p = _pad_to(gamma.astype(jnp.float32).reshape(cout, 1), cout_p, 0)
    b_p = _pad_to(beta.astype(jnp.float32).reshape(cout, 1), cout_p, 0)

    fused_bytes = 4 * (n * (cin_p + cout_p) * hw_p + cout_p * cin_p)
    if mode == "auto":
        if 2 * fused_bytes + (2 << 20) <= VMEM_BUDGET:
            mode = "fused"
        elif cin_p > 2 * cout_p or min(cin_p, cout_p) >= 256:
            mode = "cache_y"
        else:
            mode = "two_pass"

    x_spec = pl.BlockSpec((1, cin_p, tm), lambda i, j: (i, 0, j))
    w_spec = pl.BlockSpec((cout_p, cin_p), lambda i, j: (0, 0))
    vec_spec = pl.BlockSpec((cout_p, 1), lambda i, j: (0, 0))
    stat_spec = pl.BlockSpec((1, cout_p, 1), lambda i, j: (i, 0, 0))
    y_spec = pl.BlockSpec((1, cout_p, tm), lambda i, j: (i, 0, j))

    if mode == "fused":
        out3 = pl.pallas_call(
            functools.partial(_fused_kernel, n=n, inv_count=inv_count),
            out_shape=jax.ShapeDtypeStruct((n, cout_p, hw_p), jnp.float32),
            grid=(1,),
            in_specs=[
                pl.BlockSpec((n, cin_p, hw_p), lambda i: (0, 0, 0)),
                pl.BlockSpec((cout_p, cin_p), lambda i: (0, 0)),
                pl.BlockSpec((cout_p, 1), lambda i: (0, 0)),
                pl.BlockSpec((cout_p, 1), lambda i: (0, 0)),
            ],
            out_specs=pl.BlockSpec((n, cout_p, hw_p), lambda i: (0, 0, 0)),
            compiler_params=pltpu.CompilerParams(
                dimension_semantics=("arbitrary",),
                vmem_limit_bytes=VMEM_BUDGET),
        )(x3, w_p, g_p, b_p)
    else:
        # ---- pass 1: per-batch partial sum / sumsq (batch axis "parallel") ----
        if mode == "cache_y":
            y3, s, ss = pl.pallas_call(
                _stats_cache_y_kernel,
                out_shape=[jax.ShapeDtypeStruct((n, cout_p, hw_p), jnp.float32),
                           jax.ShapeDtypeStruct((n, cout_p, 1), jnp.float32),
                           jax.ShapeDtypeStruct((n, cout_p, 1), jnp.float32)],
                grid=(n, n_tiles),
                in_specs=[x_spec, w_spec],
                out_specs=[y_spec, stat_spec, stat_spec],
                compiler_params=pltpu.CompilerParams(
                    dimension_semantics=("parallel", "arbitrary"),
                    vmem_limit_bytes=VMEM_BUDGET),
            )(x3, w_p)
        else:
            s, ss = pl.pallas_call(
                _stats_kernel,
                out_shape=[jax.ShapeDtypeStruct((n, cout_p, 1), jnp.float32),
                           jax.ShapeDtypeStruct((n, cout_p, 1), jnp.float32)],
                grid=(n, n_tiles),
                in_specs=[x_spec, w_spec],
                out_specs=[stat_spec, stat_spec],
                compiler_params=pltpu.CompilerParams(
                    dimension_semantics=("parallel", "arbitrary"),
                    vmem_limit_bytes=VMEM_BUDGET),
            )(x3, w_p)
            y3 = None

        # ---- tiny per-channel BN folding in plain JAX ----
        s_tot = jnp.sum(s, axis=0)                         # (cout_p, 1)
        ss_tot = jnp.sum(ss, axis=0)
        mean = s_tot * inv_count
        var = jnp.maximum(ss_tot * inv_count - mean * mean, 0.0)
        inv_std = jax.lax.rsqrt(var + BN_EPS)
        scale = g_p * inv_std            # padded channels: gamma=0 -> scale=0
        shift = b_p - mean * scale

        # ---- pass 2 ----
        if mode == "cache_y":
            out3 = pl.pallas_call(
                _apply_cached_kernel,
                out_shape=jax.ShapeDtypeStruct((n, cout_p, hw_p), jnp.float32),
                grid=(n, n_tiles),
                in_specs=[y_spec, vec_spec, vec_spec],
                out_specs=y_spec,
                input_output_aliases={0: 0},   # normalize cached y in place
                compiler_params=pltpu.CompilerParams(
                    dimension_semantics=("parallel", "parallel"),
                    vmem_limit_bytes=VMEM_BUDGET),
            )(y3, scale, shift)
        else:
            w_scaled = w_p * scale             # fold BN scale into the weight
            out3 = pl.pallas_call(
                _apply_recompute_kernel,
                out_shape=jax.ShapeDtypeStruct((n, cout_p, hw_p), jnp.float32),
                grid=(n, n_tiles),
                in_specs=[x_spec, w_spec, vec_spec],
                out_specs=y_spec,
                compiler_params=pltpu.CompilerParams(
                    dimension_semantics=("parallel", "parallel"),
                    vmem_limit_bytes=VMEM_BUDGET),
            )(x3, w_scaled, shift)

    # Identity (elided) when no padding was applied.
    out = out3[:, :cout, :hw].reshape(n, cout, h, w)
    return out


def ch_reference(x, weight, bias, gamma, beta):
    """Pure-JAX reference mirroring PyTorch Conv2d(1x1)+BatchNorm2d(train)+ReLU."""
    y = jnp.einsum("nchw,oc->nohw", x, weight) + bias[None, :, None, None]
    mean = jnp.mean(y, axis=(0, 2, 3), keepdims=True)
    var = jnp.mean((y - mean) ** 2, axis=(0, 2, 3), keepdims=True)   # biased
    yhat = (y - mean) / jnp.sqrt(var + BN_EPS)
    out = yhat * gamma[None, :, None, None] + beta[None, :, None, None]
    return jnp.maximum(out, 0.0)


if __name__ == "__main__":
    key = jax.random.PRNGKey(0)
    k_x, k_w, k_b, k_g, k_bt = jax.random.split(key, 5)

    N, IN_CH, OUT_CH, H, W = 2, 4, 8, 16, 16

    x = jax.random.normal(k_x, (N, IN_CH, H, W), dtype=jnp.float32)
    # Deterministic synthetic parameters (Conv2d 1x1 weight/bias, BN affine).
    weight = 0.2 * jax.random.normal(k_w, (OUT_CH, IN_CH), dtype=jnp.float32)
    bias = 0.1 * jax.random.normal(k_b, (OUT_CH,), dtype=jnp.float32)
    gamma = 1.0 + 0.1 * jax.random.normal(k_g, (OUT_CH,), dtype=jnp.float32)
    beta = 0.1 * jax.random.normal(k_bt, (OUT_CH,), dtype=jnp.float32)

    ref = ch_reference(x, weight, bias, gamma, beta)

    out = jax.block_until_ready(ch_forward(x, weight, bias, gamma, beta))
    assert out.shape == (N, OUT_CH, H, W), out.shape
    assert jnp.allclose(out, ref, atol=1e-4, rtol=1e-4), float(
        jnp.max(jnp.abs(out - ref)))

    # Exercise every code path at the small shape to keep them all honest.
    for m in ("fused", "two_pass", "cache_y"):
        o = jax.block_until_ready(ch_forward(x, weight, bias, gamma, beta, mode=m))
        assert jnp.allclose(o, ref, atol=1e-4, rtol=1e-4), (
            m, float(jnp.max(jnp.abs(o - ref))))

    print("KERNEL_OK")
</pallas_src>

<mosaic_0001>
module attributes {stable_mosaic.version = 11 : i64} {
  func.func @_fused_kernel(%arg0: i32, %arg1: memref<2x8x256xf32, #tpu.memory_space<vmem>>, %arg2: memref<8x8xf32, #tpu.memory_space<vmem>>, %arg3: memref<8x1xf32, #tpu.memory_space<vmem>>, %arg4: memref<8x1xf32, #tpu.memory_space<vmem>>, %arg5: memref<2x8x256xf32, #tpu.memory_space<vmem>>) attributes {dimension_semantics = [#tpu.dimension_semantics<arbitrary>], iteration_bounds = array<i64: 1>, scalar_prefetch = 0 : i64, scratch_operands = 0 : i64, tpu.core_type = #tpu.core_type<tc>, window_params = [{pipeline_mode = #tpu.pipeline_mode<synchronous>, transform_indices = @transform_0, window_bounds = array<i64: 2, 8, 256>}, {pipeline_mode = #tpu.pipeline_mode<synchronous>, transform_indices = @transform_1, window_bounds = array<i64: 8, 8>}, {pipeline_mode = #tpu.pipeline_mode<synchronous>, transform_indices = @transform_2, window_bounds = array<i64: 8, 1>}, {pipeline_mode = #tpu.pipeline_mode<synchronous>, transform_indices = @transform_3, window_bounds = array<i64: 8, 1>}, {pipeline_mode = #tpu.pipeline_mode<synchronous>, transform_indices = @transform_4, window_bounds = array<i64: 2, 8, 256>}]} {
    %c0 = arith.constant 0 : index
    %c0_0 = arith.constant 0 : index
    %0 = vector.load %arg2[%c0, %c0_0] : memref<8x8xf32, #tpu.memory_space<vmem>>, vector<8x8xf32>
    %c0_1 = arith.constant 0 : index
    %c0_2 = arith.constant 0 : index
    %c0_3 = arith.constant 0 : index
    %1 = vector.load %arg1[%c0_1, %c0_2, %c0_3] : memref<2x8x256xf32, #tpu.memory_space<vmem>>, vector<1x8x256xf32>
    %2 = vector.shape_cast %1 : vector<1x8x256xf32> to vector<8x256xf32>
    %cst = arith.constant dense<0.000000e+00> : vector<8x256xf32>
    %3 = tpu.matmul %0, %2, %cst {dimension_numbers = #tpu.dot_dimension_numbers<[1], [0], [0], [1], [0, 0, 1, 1], [], []>} : vector<8x8xf32>, vector<8x256xf32>, vector<8x256xf32> -> vector<8x256xf32>
    %c0_4 = arith.constant 0 : index
    %c0_5 = arith.constant 0 : index
    %c0_6 = arith.constant 0 : index
    %4 = vector.load %arg5[%c0_4, %c0_5, %c0_6] : memref<2x8x256xf32, #tpu.memory_space<vmem>>, vector<1x8x256xf32>
    %5 = vector.shape_cast %4 : vector<1x8x256xf32> to vector<8x256xf32>
    %6 = vector.shape_cast %3 : vector<8x256xf32> to vector<1x8x256xf32>
    tpu.vector_store %arg5[%c0_4, %c0_5, %c0_6], %6 {strides = array<i32>} : memref<2x8x256xf32, #tpu.memory_space<vmem>>, vector<1x8x256xf32>,
    %cst_7 = arith.constant dense<0.000000e+00> : vector<8xf32>
    %7 = vector.multi_reduction <add>, %3, %cst_7 [1] : vector<8x256xf32> to vector<8xf32>
    %8 = vector.shape_cast %7 : vector<8xf32> to vector<8x1xf32>
    %9 = arith.mulf %3, %3 : vector<8x256xf32>
    %cst_8 = arith.constant dense<0.000000e+00> : vector<8xf32>
    %10 = vector.multi_reduction <add>, %9, %cst_8 [1] : vector<8x256xf32> to vector<8xf32>
    %11 = vector.shape_cast %10 : vector<8xf32> to vector<8x1xf32>
    %c0_9 = arith.constant 0 : index
    %c0_10 = arith.constant 0 : index
    %12 = vector.load %arg2[%c0_9, %c0_10] : memref<8x8xf32, #tpu.memory_space<vmem>>, vector<8x8xf32>
    %c1 = arith.constant 1 : index
    %c0_11 = arith.constant 0 : index
    %c0_12 = arith.constant 0 : index
    %13 = vector.load %arg1[%c1, %c0_11, %c0_12] : memref<2x8x256xf32, #tpu.memory_space<vmem>>, vector<1x8x256xf32>
    %14 = vector.shape_cast %13 : vector<1x8x256xf32> to vector<8x256xf32>
    %cst_13 = arith.constant dense<0.000000e+00> : vector<8x256xf32>
    %15 = tpu.matmul %12, %14, %cst_13 {dimension_numbers = #tpu.dot_dimension_numbers<[1], [0], [0], [1], [0, 0, 1, 1], [], []>} : vector<8x8xf32>, vector<8x256xf32>, vector<8x256xf32> -> vector<8x256xf32>
    %c1_14 = arith.constant 1 : index
    %c0_15 = arith.constant 0 : index
    %c0_16 = arith.constant 0 : index
    %16 = vector.load %arg5[%c1_14, %c0_15, %c0_16] : memref<2x8x256xf32, #tpu.memory_space<vmem>>, vector<1x8x256xf32>
    %17 = vector.shape_cast %16 : vector<1x8x256xf32> to vector<8x256xf32>
    %18 = vector.shape_cast %15 : vector<8x256xf32> to vector<1x8x256xf32>
    tpu.vector_store %arg5[%c1_14, %c0_15, %c0_16], %18 {strides = array<i32>} : memref<2x8x256xf32, #tpu.memory_space<vmem>>, vector<1x8x256xf32>,
    %cst_17 = arith.constant dense<0.000000e+00> : vector<8xf32>
    %19 = vector.multi_reduction <add>, %15, %cst_17 [1] : vector<8x256xf32> to vector<8xf32>
    %20 = vector.shape_cast %19 : vector<8xf32> to vector<8x1xf32>
    %21 = arith.mulf %15, %15 : vector<8x256xf32>
    %cst_18 = arith.constant dense<0.000000e+00> : vector<8xf32>
    %22 = vector.multi_reduction <add>, %21, %cst_18 [1] : vector<8x256xf32> to vector<8xf32>
    %23 = vector.shape_cast %22 : vector<8xf32> to vector<8x1xf32>
    %24 = arith.addf %8, %20 : vector<8x1xf32>
    %25 = arith.addf %11, %23 : vector<8x1xf32>
    %cst_19 = arith.constant 0.001953125 : f32
    %26 = vector.broadcast %cst_19 : f32 to vector<8x1xf32>
    %27 = arith.mulf %24, %26 : vector<8x1xf32>
    %cst_20 = arith.constant 0.001953125 : f32
    %28 = vector.broadcast %cst_20 : f32 to vector<8x1xf32>
    %29 = arith.mulf %25, %28 : vector<8x1xf32>
    %30 = arith.mulf %27, %27 : vector<8x1xf32>
    %31 = arith.subf %29, %30 : vector<8x1xf32>
    %cst_21 = arith.constant 0.000000e+00 : f32
    %32 = vector.broadcast %cst_21 : f32 to vector<8x1xf32>
    %33 = arith.maximumf %31, %32 : vector<8x1xf32>
    %cst_22 = arith.constant 9.99999974E-6 : f32
    %34 = vector.broadcast %cst_22 : f32 to vector<8x1xf32>
    %35 = arith.addf %33, %34 : vector<8x1xf32>
    %36 = math.rsqrt %35 : vector<8x1xf32>
    %c0_23 = arith.constant 0 : index
    %c0_24 = arith.constant 0 : index
    %37 = vector.load %arg3[%c0_23, %c0_24] : memref<8x1xf32, #tpu.memory_space<vmem>>, vector<8x1xf32>
    %38 = arith.mulf %37, %36 : vector<8x1xf32>
    %c0_25 = arith.constant 0 : index
    %c0_26 = arith.constant 0 : index
    %39 = vector.load %arg4[%c0_25, %c0_26] : memref<8x1xf32, #tpu.memory_space<vmem>>, vector<8x1xf32>
    %40 = arith.mulf %27, %38 : vector<8x1xf32>
    %41 = arith.subf %39, %40 : vector<8x1xf32>
    %c0_27 = arith.constant 0 : index
    %c0_28 = arith.constant 0 : index
    %c0_29 = arith.constant 0 : index
    %42 = vector.load %arg5[%c0_27, %c0_28, %c0_29] : memref<2x8x256xf32, #tpu.memory_space<vmem>>, vector<1x8x256xf32>
    %43 = vector.shape_cast %42 : vector<1x8x256xf32> to vector<8x256xf32>
    %44 = vector.broadcast %38 : vector<8x1xf32> to vector<8x256xf32>
    %45 = arith.mulf %43, %44 : vector<8x256xf32>
    %46 = vector.broadcast %41 : vector<8x1xf32> to vector<8x256xf32>
    %47 = arith.addf %45, %46 : vector<8x256xf32>
    %cst_30 = arith.constant 0.000000e+00 : f32
    %48 = vector.broadcast %cst_30 : f32 to vector<8x256xf32>
    %49 = arith.maximumf %47, %48 : vector<8x256xf32>
    %c0_31 = arith.constant 0 : index
    %c0_32 = arith.constant 0 : index
    %c0_33 = arith.constant 0 : index
    %50 = vector.load %arg5[%c0_31, %c0_32, %c0_33] : memref<2x8x256xf32, #tpu.memory_space<vmem>>, vector<1x8x256xf32>
    %51 = vector.shape_cast %50 : vector<1x8x256xf32> to vector<8x256xf32>
    %52 = vector.shape_cast %49 : vector<8x256xf32> to vector<1x8x256xf32>
    tpu.vector_store %arg5[%c0_31, %c0_32, %c0_33], %52 {strides = array<i32>} : memref<2x8x256xf32, #tpu.memory_space<vmem>>, vector<1x8x256xf32>,
    %c1_34 = arith.constant 1 : index
    %c0_35 = arith.constant 0 : index
    %c0_36 = arith.constant 0 : index
    %53 = vector.load %arg5[%c1_34, %c0_35, %c0_36] : memref<2x8x256xf32, #tpu.memory_space<vmem>>, vector<1x8x256xf32>
    %54 = vector.shape_cast %53 : vector<1x8x256xf32> to vector<8x256xf32>
    %55 = vector.broadcast %38 : vector<8x1xf32> to vector<8x256xf32>
    %56 = arith.mulf %54, %55 : vector<8x256xf32>
    %57 = vector.broadcast %41 : vector<8x1xf32> to vector<8x256xf32>
    %58 = arith.addf %56, %57 : vector<8x256xf32>
    %cst_37 = arith.constant 0.000000e+00 : f32
    %59 = vector.broadcast %cst_37 : f32 to vector<8x256xf32>
    %60 = arith.maximumf %58, %59 : vector<8x256xf32>
    %c1_38 = arith.constant 1 : index
    %c0_39 = arith.constant 0 : index
    %c0_40 = arith.constant 0 : index
    %61 = vector.load %arg5[%c1_38, %c0_39, %c0_40] : memref<2x8x256xf32, #tpu.memory_space<vmem>>, vector<1x8x256xf32>
    %62 = vector.shape_cast %61 : vector<1x8x256xf32> to vector<8x256xf32>
    %63 = vector.shape_cast %60 : vector<8x256xf32> to vector<1x8x256xf32>
    tpu.vector_store %arg5[%c1_38, %c0_39, %c0_40], %63 {strides = array<i32>} : memref<2x8x256xf32, #tpu.memory_space<vmem>>, vector<1x8x256xf32>,
    return
  }
  func.func @transform_0(%arg0: i32) -> (i32, i32, i32) {
    %c0_i32 = arith.constant 0 : i32
    %c0_i32_0 = arith.constant 0 : i32
    %c0_i32_1 = arith.constant 0 : i32
    %c0_i32_2 = arith.constant 0 : i32
    return %c0_i32, %c0_i32_0, %c0_i32_1 : i32, i32, i32
  }
  func.func @transform_1(%arg0: i32) -> (i32, i32) {
    %c0_i32 = arith.constant 0 : i32
    %c0_i32_0 = arith.constant 0 : i32
    %c0_i32_1 = arith.constant 0 : i32
    return %c0_i32, %c0_i32_0 : i32, i32
  }
  func.func @transform_2(%arg0: i32) -> (i32, i32) {
    %c0_i32 = arith.constant 0 : i32
    %c0_i32_0 = arith.constant 0 : i32
    %c0_i32_1 = arith.constant 0 : i32
    return %c0_i32, %c0_i32_0 : i32, i32
  }
  func.func @transform_3(%arg0: i32) -> (i32, i32) {
    %c0_i32 = arith.constant 0 : i32
    %c0_i32_0 = arith.constant 0 : i32
    %c0_i32_1 = arith.constant 0 : i32
    return %c0_i32, %c0_i32_0 : i32, i32
  }
  func.func @transform_4(%arg0: i32) -> (i32, i32, i32) {
    %c0_i32 = arith.constant 0 : i32
    %c0_i32_0 = arith.constant 0 : i32
    %c0_i32_1 = arith.constant 0 : i32
    %c0_i32_2 = arith.constant 0 : i32
    return %c0_i32, %c0_i32_0, %c0_i32_1 : i32, i32, i32
  }
}

</mosaic_0001>

<llo_original>
// kernel: ch_forward.1
$region0: #{ch_forward.1}
  #allocation0 [shape = 'u32[]', space=smem, size = 0x4, offset = 0x4, fixed_abs, tag = 'smem constant byte address 0x4 - core index']
  #allocation1 [shape = 'u32[72,128]{1,0:T(1,128)}', space=vmem, size = 0x9000, scoped, tag = 'internal scratch']
  %s0 = inlined_call_operand.vmem [shape: f32[2,8,256], index: 0, kind: input, shape index: {}]
  %s1 = inlined_call_operand.vmem [shape: f32[8,8], index: 1, kind: input, shape index: {}]
  %s2 = inlined_call_operand.vmem [shape: f32[8,1], index: 2, kind: input, shape index: {}]
  %s3 = inlined_call_operand.vmem [shape: f32[8,1], index: 3, kind: input, shape index: {}]
  %s4 = inlined_call_operand.vmem [shape: f32[2,8,256], index: 4, kind: output, shape index: {}]
  %s5 = sld [smem:[#allocation0]]
  $region26: #{ch_forward.1} parent=0
    _
  %s7 = ssub.s32 1, %s5
  %s8 = scalar_select 0, %s7, %s5
  // Predicated region
  $region2: #{ch_forward.1} parent=0 // pred_check
    _
  $region3: #{ch_forward.1} parent=0 // pred_check_branch
    %10 = sbr.rel (0) target = $region5
  $region4: #{ch_forward.1} parent=0 // pred_region
    _
  $region5: #{ch_forward.1} parent=0 // pred_fallthru
    _
  // Predicated region
  $region6: #{ch_forward.1} parent=0 // pred_check
    _
  $region7: #{ch_forward.1} parent=0 // pred_check_branch
    %12 = sbr.rel (0) target = $region9
  $region8: #{ch_forward.1} parent=0 // pred_region
    _
  $region9: #{ch_forward.1} parent=0 // pred_fallthru
    _
  // Predicated region
  $region10: #{ch_forward.1} parent=0 // pred_check
    _
  $region11: #{ch_forward.1} parent=0 // pred_check_branch
    %14 = sbr.rel (0) target = $region13
  $region12: #{ch_forward.1} parent=0 // pred_region
    _
  $region13: #{ch_forward.1} parent=0 // pred_fallthru
    _
  // Predicated region
  $region14: #{ch_forward.1} parent=0 // pred_check
    _
  $region15: #{ch_forward.1} parent=0 // pred_check_branch
    %16 = sbr.rel (0) target = $region17
  $region16: #{ch_forward.1} parent=0 // pred_region
    _
  $region17: #{ch_forward.1} parent=0 // pred_fallthru
    _
  %v17 = vld [vmem:[%s1] sm:$0xff]
  %v18 = vld [vmem:[%s0] sm:$0xff]
  %v19 = vld [vmem:[%s0 + $0x8] sm:$0xff]
  %vm20 = vcmask 64512
  %v22 = vsel %vm20, %v17, 0
  %24 = vmatpush.msra.mxu0 0.0
  %25 = vmatpush.msra.mxu0 0.0
  %26 = vmatpush.msra.mxu0 0.0
  %27 = vmatpush.msra.mxu0 0.0
  %28 = vmatpush.msra.mxu0 0.0
  %29 = vmatpush.msra.mxu0 0.0
  %30 = vmatpush.msra.mxu0 0.0
  %31 = vmatpush.msra.mxu0 0.0
  %32 = vmatpush.msra.mxu0 0.0
  %33 = vmatpush.msra.mxu0 0.0
  %34 = vmatpush.msra.mxu0 0.0
  %35 = vmatpush.msra.mxu0 0.0
  %36 = vmatpush.msra.mxu0 0.0
  %37 = vmatpush.msra.mxu0 0.0
  %38 = vmatpush.msra.mxu0 0.0
  %39 = vmatpush.msra.mxu0 %v18
  %40 = vmatmul.f32.gmra.mxu0 %v22
  %v41 = vpop.f32.mrf.mxu0
  %v42 = vadd.f32 0.0, %v41
  %43 = vdwg.mxu0
  %44 = vmatpush.msra.mxu0 0.0
  %45 = vmatpush.msra.mxu0 0.0
  %46 = vmatpush.msra.mxu0 0.0
  %47 = vmatpush.msra.mxu0 0.0
  %48 = vmatpush.msra.mxu0 0.0
  %49 = vmatpush.msra.mxu0 0.0
  %50 = vmatpush.msra.mxu0 0.0
  %51 = vmatpush.msra.mxu0 0.0
  %52 = vmatpush.msra.mxu0 0.0
  %53 = vmatpush.msra.mxu0 0.0
  %54 = vmatpush.msra.mxu0 0.0
  %55 = vmatpush.msra.mxu0 0.0
  %56 = vmatpush.msra.mxu0 0.0
  %57 = vmatpush.msra.mxu0 0.0
  %58 = vmatpush.msra.mxu0 0.0
  %59 = vmatpush.msra.mxu0 %v19
  %60 = vmatmul.f32.gmra.mxu0 %v22
  %v61 = vpop.f32.mrf.mxu0
  %v62 = vadd.f32 0.0, %v61
  %63 = vdwg.mxu0
  %64 = vst [vmem:[%s4] sm:$0xff] %v42
  %65 = vst [vmem:[%s4 + $0x8] sm:$0xff] %v62
  %v66 = vadd.f32 %v42, %v62
  %67 = vadd.xlane.f32.xlu0 %v66
  %v68 = vpop.xlane.xlu0 %67
  %v69 = vmul.f32 %v42, %v42
  %v70 = vmul.f32 %v62, %v62
  %v71 = vadd.f32 %v69, %v70
  %72 = vadd.xlane.f32.xlu0 %v71
  %v73 = vpop.xlane.xlu0 %72
  %v74 = vld [vmem:[%s1] sm:$0xff]
  %s75 = scalar_lea.vmem %s0, 16
  %v76 = vld [vmem:[%s75] sm:$0xff]
  %v77 = vld [vmem:[%s75 + $0x8] sm:$0xff]
  %v79 = vsel %vm20, %v74, 0
  %81 = vmatpush.msra.mxu0 0.0
  %82 = vmatpush.msra.mxu0 0.0
  %83 = vmatpush.msra.mxu0 0.0
  %84 = vmatpush.msra.mxu0 0.0
  %85 = vmatpush.msra.mxu0 0.0
  %86 = vmatpush.msra.mxu0 0.0
  %87 = vmatpush.msra.mxu0 0.0
  %88 = vmatpush.msra.mxu0 0.0
  %89 = vmatpush.msra.mxu0 0.0
  %90 = vmatpush.msra.mxu0 0.0
  %91 = vmatpush.msra.mxu0 0.0
  %92 = vmatpush.msra.mxu0 0.0
  %93 = vmatpush.msra.mxu0 0.0
  %94 = vmatpush.msra.mxu0 0.0
  %95 = vmatpush.msra.mxu0 0.0
  %96 = vmatpush.msra.mxu0 %v76
  %97 = vmatmul.f32.gmra.mxu0 %v79
  %v98 = vpop.f32.mrf.mxu0
  %v99 = vadd.f32 0.0, %v98
  %100 = vdwg.mxu0
  %101 = vmatpush.msra.mxu0 0.0
  %102 = vmatpush.msra.mxu0 0.0
  %103 = vmatpush.msra.mxu0 0.0
  %104 = vmatpush.msra.mxu0 0.0
  %105 = vmatpush.msra.mxu0 0.0
  %106 = vmatpush.msra.mxu0 0.0
  %107 = vmatpush.msra.mxu0 0.0
  %108 = vmatpush.msra.mxu0 0.0
  %109 = vmatpush.msra.mxu0 0.0
  %110 = vmatpush.msra.mxu0 0.0
  %111 = vmatpush.msra.mxu0 0.0
  %112 = vmatpush.msra.mxu0 0.0
  %113 = vmatpush.msra.mxu0 0.0
  %114 = vmatpush.msra.mxu0 0.0
  %115 = vmatpush.msra.mxu0 0.0
  %116 = vmatpush.msra.mxu0 %v77
  %117 = vmatmul.f32.gmra.mxu0 %v79
  %v118 = vpop.f32.mrf.mxu0
  %v119 = vadd.f32 0.0, %v118
  %120 = vdwg.mxu0
  %s121 = scalar_lea.vmem %s4, 16
  %122 = vst [vmem:[%s121] sm:$0xff] %v99
  %123 = vst [vmem:[%s121 + $0x8] sm:$0xff] %v119
  %v124 = vadd.f32 %v99, %v119
  %125 = vadd.xlane.f32.xlu0 %v124
  %v126 = vpop.xlane.xlu0 %125
  %v127 = vmul.f32 %v99, %v99
  %v128 = vmul.f32 %v119, %v119
  %v129 = vadd.f32 %v127, %v128
  %130 = vadd.xlane.f32.xlu0 %v129
  %v131 = vpop.xlane.xlu0 %130
  %v132 = vadd.f32 %v68, %v126
  %v133 = vadd.f32 %v73, %v131
  %v134 = vmul.f32 %v132, 0.001953125
  %v135 = vmul.f32 %v133, 0.001953125
  %v136 = vmul.f32 %v134, %v134
  %v137 = vsub.f32 %v135, %v136
  %v138 = vmax.f32 %v137, 0.0
  %v139 = vadd.f32 %v138, 1e-05
  %v140 = vrsqrt.pop %v139
  %v141 = vmul.f32 %v140, %v139
  %v142 = vmul.f32 %v141, %v140
  %v143 = vmul.f32 0.5, %v142
  %v144 = vsub.f32 1.5, %v143
  %v145 = vmul.f32 %v140, %v144
  %vm146 = vweird.f32 %v139
  %vm147 = vweird.f32 %v140
  %vm148 = vmor %vm146, %vm147
  %v149 = vsel %vm148, %v140, %v145
  %v150 = vld [vmem:[%s2] sm:$0xff]
  %v151 = vmul.f32 %v150, %v149
  %v152 = vld [vmem:[%s3] sm:$0xff]
  %v153 = vmul.f32 %v134, %v151
  %v154 = vsub.f32 %v152, %v153
  %v155 = vld [vmem:[%s4] sm:$0xff]
  %v156 = vld [vmem:[%s4 + $0x8] sm:$0xff]
  %158 = vset.pattern.permute.xlu0 0
  %159 = vperm.xlu0 %158, %v151
  %v160 = vpop.permute.xlu0 %159
  %v162 = vmul.f32 %v155, %v160
  %v163 = vmul.f32 %v156, %v160
  %165 = vset.pattern.permute.xlu0 0
  %166 = vperm.xlu0 %165, %v154
  %v167 = vpop.permute.xlu0 %166
  %v169 = vadd.f32 %v162, %v167
  %v170 = vadd.f32 %v163, %v167
  %v171 = vmax.f32 %v169, 0.0
  %v172 = vmax.f32 %v170, 0.0
  %173 = vst [vmem:[%s4] sm:$0xff] %v171
  %174 = vst [vmem:[%s4 + $0x8] sm:$0xff] %v172
  %v175 = vld [vmem:[%s121] sm:$0xff]
  %v176 = vld [vmem:[%s121 + $0x8] sm:$0xff]
  %v177 = vmul.f32 %v175, %v160
  %v178 = vmul.f32 %v176, %v160
  %v179 = vadd.f32 %v177, %v167
  %v180 = vadd.f32 %v178, %v167
  %v181 = vmax.f32 %v179, 0.0
  %v182 = vmax.f32 %v180, 0.0
  %183 = vst [vmem:[%s121] sm:$0xff] %v181
  %184 = vst [vmem:[%s121 + $0x8] sm:$0xff] %v182
  // Predicated region
  $region18: #{ch_forward.1} parent=0 // pred_check
    _
  $region19: #{ch_forward.1} parent=0 // pred_check_branch
    %186 = sbr.rel (0) target = $region21
  $region20: #{ch_forward.1} parent=0 // pred_region
    _
  $region21: #{ch_forward.1} parent=0 // pred_fallthru
    _
  // Predicated region
  $region22: #{ch_forward.1} parent=0 // pred_check
    _
  $region23: #{ch_forward.1} parent=0 // pred_check_branch
    %188 = sbr.rel (0) target = $region25
  $region24: #{ch_forward.1} parent=0 // pred_region
    _
  $region25: #{ch_forward.1} parent=0 // pred_fallthru
    _

</llo_original>
